<compile_context>
chip_gen: v7x
topology: tpu7x:2x2x1
jax: 0.10.0
libtpu: 0.0.40
codegen_flags: <defaults>
</compile_context>

<pallas_src>
import jax
import jax.numpy as jnp
from jax import lax
from jax.experimental import pallas as pl
from jax.experimental.pallas import tpu as pltpu

EPS = 1e-5


def reduction_dim_kernel(x_ref, w_ref, p2_ref, o_ref):
    # ---- BN1 (training mode, two-pass stats, f32) on the FULL (B, S) activation slab ----
    # x block index is constant across the grid -> DMA'd once; recompute per D tile is cheap
    # (hidden under the weight DMA) and megacore-safe.
    x = x_ref[...].astype(jnp.float32)                       # (B, S)
    mu1 = jnp.mean(x, axis=0, keepdims=True)
    xc = x - mu1
    var1 = jnp.mean(xc * xc, axis=0, keepdims=True)          # biased, two-pass
    xn = (xc * lax.rsqrt(var1 + EPS)).astype(jnp.bfloat16)   # BN1 gamma folded into W

    # ---- Linear: bf16 MXU matmul, f32 accumulation, straight into the output tile ----
    y = jnp.dot(xn, w_ref[...], preferred_element_type=jnp.float32)   # (B, td) f32

    # ---- BN2 (training mode) + affine; stats are per output channel -> tile-local ----
    mu2 = jnp.mean(y, axis=0, keepdims=True)
    yc = y - mu2
    var2 = jnp.mean(yc * yc, axis=0, keepdims=True)
    yn = yc * lax.rsqrt(var2 + EPS)
    o_ref[...] = (yn * p2_ref[0:1, :] + p2_ref[1:2, :]).astype(o_ref.dtype)


def prepare_params(params):
    """One-time parameter prep (do NOT redo per forward call): fold BN1 gamma into the weight
    and cast to bf16; pack BN2 gamma/beta into one lane-dense (2, D) f32 operand."""
    w_eff = (params["bn1_gamma"][:, None] * params["w"]).astype(jnp.bfloat16)   # (S, D)
    p2 = jnp.stack([params["bn2_gamma"], params["bn2_beta"]], axis=0).astype(jnp.float32)
    return {"w_eff": w_eff, "p2": p2}


def _pick_td(S, D, *, weight_budget_bytes=16 << 20):
    """Largest lane-dense d_model tile (256-multiples preferred for the v6e/v7x 256x256 MXU,
    128 fallback for v5e) that divides D and keeps the double-buffered bf16 weight tile
    (2 bufs x S x td x 2 B) within budget.  Falls back to a full-array block otherwise."""
    for td in (2048, 1024, 768, 512, 256, 128):
        if td <= D and D % td == 0 and 2 * S * td * 2 <= weight_budget_bytes:
            return td
    return D  # full-array block: always legal regardless of (8, 128) alignment


def reduction_dimension_forward(x, prepared, *, td=None):
    """x: (B, statistic_nums) float32. Returns (1, B, d_model), matching `out.unsqueeze(0)`."""
    B, S = x.shape
    S_w, D = prepared["w_eff"].shape
    assert S == S_w, (S, S_w)
    assert B > 1, "training-mode BatchNorm needs batch statistics (PyTorch raises on B=1)"

    if td is None:
        td = _pick_td(S, D)
    assert td == D or (D % td == 0 and td % 128 == 0), (D, td)

    grid = (D // td,)
    out = pl.pallas_call(
        reduction_dim_kernel,
        out_shape=jax.ShapeDtypeStruct((B, D), jnp.float32),
        grid_spec=pltpu.PrefetchScalarGridSpec(
            num_scalar_prefetch=0,
            grid=grid,
            in_specs=[
                pl.BlockSpec((B, S), lambda j: (0, 0)),    # full x slab, DMA'd once
                pl.BlockSpec((S, td), lambda j: (0, j)),   # bf16 weight column tile (dominant stream)
                pl.BlockSpec((2, td), lambda j: (0, j)),   # [gamma2; beta2] rows
            ],
            out_specs=pl.BlockSpec((B, td), lambda j: (0, j)),
        ),
        compiler_params=pltpu.CompilerParams(
            # Single D axis is "parallel": on v7x the two TensorCores each take half the
            # output-channel tiles; on v5e/v6e this is perf-neutral.
            dimension_semantics=("parallel",),
            # 16 MiB weight double-buffer budget + small x/out/p2 buffers: fits v5e/v6e and
            # stays well under v7x's 64 MiB physical VMEM.
            vmem_limit_bytes=32 * 1024 * 1024,
        ),
        # If profiling on v5e shows exposed weight DMA, add pipeline_mode=pl.Buffered(3) on the
        # weight BlockSpec (cheap in VMEM, keeps the DMA queue full on ~820 GB/s HBM).
    )(x, prepared["w_eff"], prepared["p2"])

    return out[None, :, :]  # unsqueeze(dim=0)


def init_params(key, statistic_nums, d_model):
    """PyTorch defaults: BatchNorm1d weight=1, bias=0; Linear U(-1/sqrt(in), 1/sqrt(in))."""
    kw, kb = jax.random.split(key)
    bound = 1.0 / jnp.sqrt(jnp.float32(statistic_nums))
    # PyTorch Linear weight is (d_model, statistic_nums); store transposed (S, D) for x @ W.
    w = jax.random.uniform(kw, (statistic_nums, d_model), jnp.float32, -bound, bound)
    b = jax.random.uniform(kb, (d_model,), jnp.float32, -bound, bound)
    return {
        "bn1_gamma": jnp.ones((statistic_nums,), jnp.float32),
        "bn1_beta": jnp.zeros((statistic_nums,), jnp.float32),
        "w": w,
        "b": b,
        "bn2_gamma": jnp.ones((d_model,), jnp.float32),
        "bn2_beta": jnp.zeros((d_model,), jnp.float32),
    }


def reference_forward(x, params):
    """Pure-JAX f32 reference of the PyTorch module (training-mode BN), including bias/beta."""
    mean1 = x.mean(0)
    var1 = ((x - mean1) ** 2).mean(0)
    xn = (x - mean1) / jnp.sqrt(var1 + EPS) * params["bn1_gamma"] + params["bn1_beta"]
    y = xn @ params["w"] + params["b"]
    mean2 = y.mean(0)
    var2 = ((y - mean2) ** 2).mean(0)
    yn = (y - mean2) / jnp.sqrt(var2 + EPS) * params["bn2_gamma"] + params["bn2_beta"]
    return yn[None, :, :]


if __name__ == "__main__":
    B = 8                # batch: both BatchNorms reduce over this axis -> cannot be tiled
    statistic_nums = 96  # small, non-128-aligned on purpose: full-array x/weight-row block
    d_model = 256        # lane-dense; auto td=256 (1 tile) and forced td=128 (2 tiles) both tested

    key = jax.random.PRNGKey(0)
    k_x, k_p, k1, k2, k3, k4 = jax.random.split(key, 6)
    x = jax.random.normal(k_x, (B, statistic_nums), jnp.float32) + 0.5
    params = init_params(k_p, statistic_nums, d_model)
    # Perturb the affine params away from the identity defaults so the gamma fold and the
    # beta/bias cancellation are actually exercised by the check.
    params["bn1_gamma"] = 1.0 + 0.1 * jax.random.normal(k1, (statistic_nums,), jnp.float32)
    params["bn1_beta"] = 0.1 * jax.random.normal(k2, (statistic_nums,), jnp.float32)
    params["bn2_gamma"] = 1.0 + 0.1 * jax.random.normal(k3, (d_model,), jnp.float32)
    params["bn2_beta"] = 0.1 * jax.random.normal(k4, (d_model,), jnp.float32)

    prepared = prepare_params(params)   # one-time weight fold + bf16 cast (cached)
    ref = reference_forward(x, params)

    # 1) auto tile (single grid step, full-array blocks)
    out = jax.block_until_ready(reduction_dimension_forward(x, prepared))
    assert out.shape == (1, B, d_model), out.shape
    assert jnp.all(jnp.isfinite(out))
    err = float(jnp.max(jnp.abs(out - ref)))
    assert err < 5e-2, f"auto-tile max abs error vs reference: {err}"

    # 2) forced td=128 (2 parallel D tiles) to exercise the tiled path
    out2 = jax.block_until_ready(reduction_dimension_forward(x, prepared, td=128))
    err2 = float(jnp.max(jnp.abs(out2 - ref)))
    assert err2 < 5e-2, f"tiled max abs error vs reference: {err2}"

    print("KERNEL_OK")
</pallas_src>

<mosaic_0001>
module attributes {stable_mosaic.version = 11 : i64} {
  func.func @reduction_dim_kernel(%arg0: i32, %arg1: memref<8x96xf32, #tpu.memory_space<vmem>>, %arg2: memref<96x256xbf16, #tpu.memory_space<vmem>>, %arg3: memref<2x256xf32, #tpu.memory_space<vmem>>, %arg4: memref<8x256xf32, #tpu.memory_space<vmem>>) attributes {dimension_semantics = [#tpu.dimension_semantics<parallel>], iteration_bounds = array<i64: 1>, scalar_prefetch = 0 : i64, scratch_operands = 0 : i64, tpu.core_type = #tpu.core_type<tc>, window_params = [{pipeline_mode = #tpu.pipeline_mode<synchronous>, transform_indices = @transform_0, window_bounds = array<i64: 8, 96>}, {transform_indices = @transform_1, window_bounds = array<i64: 96, 256>}, {transform_indices = @transform_2, window_bounds = array<i64: 2, 256>}, {transform_indices = @transform_3, window_bounds = array<i64: 8, 256>}]} {
    %c0 = arith.constant 0 : index
    %c0_0 = arith.constant 0 : index
    %0 = vector.load %arg1[%c0, %c0_0] : memref<8x96xf32, #tpu.memory_space<vmem>>, vector<8x96xf32>
    %cst = arith.constant dense<0.000000e+00> : vector<96xf32>
    %1 = vector.multi_reduction <add>, %0, %cst [0] : vector<8x96xf32> to vector<96xf32>
    %2 = vector.shape_cast %1 : vector<96xf32> to vector<1x96xf32>
    %cst_1 = arith.constant 8.000000e+00 : f32
    %3 = vector.broadcast %cst_1 : f32 to vector<1x96xf32>
    %4 = arith.divf %2, %3 : vector<1x96xf32>
    %5 = vector.broadcast %4 : vector<1x96xf32> to vector<8x96xf32>
    %6 = arith.subf %0, %5 : vector<8x96xf32>
    %7 = arith.mulf %6, %6 : vector<8x96xf32>
    %cst_2 = arith.constant dense<0.000000e+00> : vector<96xf32>
    %8 = vector.multi_reduction <add>, %7, %cst_2 [0] : vector<8x96xf32> to vector<96xf32>
    %9 = vector.shape_cast %8 : vector<96xf32> to vector<1x96xf32>
    %cst_3 = arith.constant 8.000000e+00 : f32
    %10 = vector.broadcast %cst_3 : f32 to vector<1x96xf32>
    %11 = arith.divf %9, %10 : vector<1x96xf32>
    %cst_4 = arith.constant 9.99999974E-6 : f32
    %12 = vector.broadcast %cst_4 : f32 to vector<1x96xf32>
    %13 = arith.addf %11, %12 : vector<1x96xf32>
    %14 = math.rsqrt %13 : vector<1x96xf32>
    %15 = vector.broadcast %14 : vector<1x96xf32> to vector<8x96xf32>
    %16 = arith.mulf %6, %15 : vector<8x96xf32>
    %17 = arith.truncf %16 : vector<8x96xf32> to vector<8x96xbf16>
    %c0_5 = arith.constant 0 : index
    %c0_6 = arith.constant 0 : index
    %18 = vector.load %arg2[%c0_5, %c0_6] : memref<96x256xbf16, #tpu.memory_space<vmem>>, vector<96x256xbf16>
    %cst_7 = arith.constant dense<0.000000e+00> : vector<8x256xf32>
    %19 = tpu.matmul %17, %18, %cst_7 {dimension_numbers = #tpu.dot_dimension_numbers<[1], [0], [0], [1], [0, 0, 1, 1], [], []>} : vector<8x96xbf16>, vector<96x256xbf16>, vector<8x256xf32> -> vector<8x256xf32>
    %cst_8 = arith.constant dense<0.000000e+00> : vector<256xf32>
    %20 = vector.multi_reduction <add>, %19, %cst_8 [0] : vector<8x256xf32> to vector<256xf32>
    %21 = vector.shape_cast %20 : vector<256xf32> to vector<1x256xf32>
    %cst_9 = arith.constant 8.000000e+00 : f32
    %22 = vector.broadcast %cst_9 : f32 to vector<1x256xf32>
    %23 = arith.divf %21, %22 : vector<1x256xf32>
    %24 = vector.broadcast %23 : vector<1x256xf32> to vector<8x256xf32>
    %25 = arith.subf %19, %24 : vector<8x256xf32>
    %26 = arith.mulf %25, %25 : vector<8x256xf32>
    %cst_10 = arith.constant dense<0.000000e+00> : vector<256xf32>
    %27 = vector.multi_reduction <add>, %26, %cst_10 [0] : vector<8x256xf32> to vector<256xf32>
    %28 = vector.shape_cast %27 : vector<256xf32> to vector<1x256xf32>
    %cst_11 = arith.constant 8.000000e+00 : f32
    %29 = vector.broadcast %cst_11 : f32 to vector<1x256xf32>
    %30 = arith.divf %28, %29 : vector<1x256xf32>
    %cst_12 = arith.constant 9.99999974E-6 : f32
    %31 = vector.broadcast %cst_12 : f32 to vector<1x256xf32>
    %32 = arith.addf %30, %31 : vector<1x256xf32>
    %33 = math.rsqrt %32 : vector<1x256xf32>
    %34 = vector.broadcast %33 : vector<1x256xf32> to vector<8x256xf32>
    %35 = arith.mulf %25, %34 : vector<8x256xf32>
    %c0_13 = arith.constant 0 : index
    %c0_14 = arith.constant 0 : index
    %36 = vector.load %arg3[%c0_13, %c0_14] : memref<2x256xf32, #tpu.memory_space<vmem>>, vector<1x256xf32>
    %37 = vector.broadcast %36 : vector<1x256xf32> to vector<8x256xf32>
    %38 = arith.mulf %35, %37 : vector<8x256xf32>
    %c1 = arith.constant 1 : index
    %c0_15 = arith.constant 0 : index
    %39 = vector.load %arg3[%c1, %c0_15] : memref<2x256xf32, #tpu.memory_space<vmem>>, vector<1x256xf32>
    %40 = vector.broadcast %39 : vector<1x256xf32> to vector<8x256xf32>
    %41 = arith.addf %38, %40 : vector<8x256xf32>
    %c0_16 = arith.constant 0 : index
    %c0_17 = arith.constant 0 : index
    %42 = vector.load %arg4[%c0_16, %c0_17] : memref<8x256xf32, #tpu.memory_space<vmem>>, vector<8x256xf32>
    tpu.vector_store %arg4[%c0_16, %c0_17], %41 {strides = array<i32>} : memref<8x256xf32, #tpu.memory_space<vmem>>, vector<8x256xf32>,
    return
  }
  func.func @transform_0(%arg0: i32) -> (i32, i32) {
    %c0_i32 = arith.constant 0 : i32
    %c0_i32_0 = arith.constant 0 : i32
    %c0_i32_1 = arith.constant 0 : i32
    return %c0_i32, %c0_i32_0 : i32, i32
  }
  func.func @transform_1(%arg0: i32) -> (i32, i32) {
    %c0_i32 = arith.constant 0 : i32
    %c0_i32_0 = arith.constant 0 : i32
    return %c0_i32, %arg0 : i32, i32
  }
  func.func @transform_2(%arg0: i32) -> (i32, i32) {
    %c0_i32 = arith.constant 0 : i32
    %c0_i32_0 = arith.constant 0 : i32
    return %c0_i32, %arg0 : i32, i32
  }
  func.func @transform_3(%arg0: i32) -> (i32, i32) {
    %c0_i32 = arith.constant 0 : i32
    %c0_i32_0 = arith.constant 0 : i32
    return %c0_i32, %arg0 : i32, i32
  }
}

</mosaic_0001>

<llo_original>
// kernel: tpu_custom_call.1
$region0: #{tpu_custom_call.1}
  #allocation0 [shape = 'u32[]', space=smem, size = 0x4, offset = 0x4, fixed_abs, tag = 'smem constant byte address 0x4 - core index']
  #allocation1 [shape = 'u32[144,128]{1,0:T(1,128)}', space=vmem, size = 0x12000, scoped, tag = 'internal scratch']
  %s0 = inlined_call_operand.hbm [shape: f32[8,96], index: 0, kind: input, shape index: {}]
  %s1 = inlined_call_operand.hbm [shape: bf16[96,256], index: 1, kind: input, shape index: {}]
  %s2 = inlined_call_operand.vmem [shape: f32[2,256], index: 2, kind: input, shape index: {}]
  %s3 = inlined_call_operand.hbm [shape: f32[8,256], index: 3, kind: output, shape index: {}]
  %s4 = sld [smem:[#allocation0]]
  $region30: #{tpu_custom_call.1} parent=0
    _
  %s6 = ssub.s32 1, %s4
  %s7 = scalar_select 0, %s6, %s4
  $region1: #{tpu_custom_call.1} parent=0
    #allocation2 [shape = 'u8[4096]{0}', space=vmem, size = 0x1000, scoped, tag = 'input window, operand 0, single buffered']
    #allocation3 [shape = 's32[1]{0}', space=sflag, size = 0x4, scoped, tag = 'scoped memory for tpu_custom_call.1']
    #allocation4 [shape = 's32[1]{0}', space=sflag, size = 0x4, scoped, tag = 'scoped memory for tpu_custom_call.1']
    #allocation5 [shape = 'u8[49152]{0}', space=vmem, size = 0xc000, scoped, tag = 'input window, operand 1, single buffered']
    #allocation6 [shape = 's32[1]{0}', space=sflag, size = 0x4, scoped, tag = 'scoped memory for tpu_custom_call.1']
    #allocation7 [shape = 'u8[8192]{0}', space=vmem, size = 0x2000, scoped, tag = 'output window, operand 0, single buffered']
    %8 = vsyncpa [#allocation3], 0
    %9 = vsyncpa [#allocation6], 0
    %10 = vsyncpa [#allocation4], 0
    // Predicated region
    $region2: #{tpu_custom_call.1} parent=1 // pred_check
      _
    $region3: #{tpu_custom_call.1} parent=1 // pred_check_branch
      %12 = sbr.rel (0) target = $region5
    $region4: #{tpu_custom_call.1} parent=1 // pred_region
      %s14 = ssub.s32 128, 128
      %15 = vsyncadd [#allocation3], %s14
      %s17 = sshll.u32 [#allocation2], 4
      %s18 = int_to_ptr.vmem [resolvable:$true] %s17
      %20 = dma.hbm_to_vmem [thread:$0]  %s0, 128, %s18, [#allocation3]
    $region5: #{tpu_custom_call.1} parent=1 // pred_fallthru
      _
    // Predicated region
    $region6: #{tpu_custom_call.1} parent=1 // pred_check
      _
    $region7: #{tpu_custom_call.1} parent=1 // pred_check_branch
      %22 = sbr.rel (0) target = $region9
    $region8: #{tpu_custom_call.1} parent=1 // pred_region
      %s24 = ssub.s32 1536, 1536
      %25 = vsyncadd [#allocation6], %s24
      %s26 = sshll.u32 [#allocation5], 4
      %s27 = int_to_ptr.vmem [resolvable:$true] %s26
      %32 = dma.hbm_to_vmem [thread:$0]  %s1, 1536, %s27, [#allocation6], 128, 128, 8
    $region9: #{tpu_custom_call.1} parent=1 // pred_fallthru
      _
    // Predicated region
    $region10: #{tpu_custom_call.1} parent=1 // pred_check
      _
    $region11: #{tpu_custom_call.1} parent=1 // pred_check_branch
      %34 = sbr.rel (0) target = $region13
    $region12: #{tpu_custom_call.1} parent=1 // pred_region
      _
    $region13: #{tpu_custom_call.1} parent=1 // pred_fallthru
      _
    // Predicated region
    $region14: #{tpu_custom_call.1} parent=1 // pred_check
      _
    $region15: #{tpu_custom_call.1} parent=1 // pred_check_branch
      %36 = sbr.rel (0) target = $region17
    $region16: #{tpu_custom_call.1} parent=1 // pred_region
      %37 = dma.done [#allocation3], 128
    $region17: #{tpu_custom_call.1} parent=1 // pred_fallthru
      _
    // Predicated region
    $region18: #{tpu_custom_call.1} parent=1 // pred_check
      _
    $region19: #{tpu_custom_call.1} parent=1 // pred_check_branch
      %39 = sbr.rel (0) target = $region21
    $region20: #{tpu_custom_call.1} parent=1 // pred_region
      %40 = dma.done [#allocation6], 1536
    $region21: #{tpu_custom_call.1} parent=1 // pred_fallthru
      _
    %v42 = vld [vmem:[#allocation2] sm:$0xff]
    %vm43 = vcmask 785408
    %v44 = vsel %vm43, %v42, 0.0
    %v45 = vrot.slane %v44, 4
    %v46 = vadd.f32 %v44, %v45
    %v47 = vrot.slane %v46, 2
    %v48 = vadd.f32 %v46, %v47
    %v49 = vrot.slane %v48, 1
    %v50 = vadd.f32 %v48, %v49
    %v51 = vrcp.pop 8.0
    %v52 = vmul.f32 %v50, %v51
    %v53 = vsub.f32 %v42, %v52
    %v54 = vmul.f32 %v53, %v53
    %v55 = vsel %vm43, %v54, 0.0
    %v56 = vrot.slane %v55, 4
    %v57 = vadd.f32 %v55, %v56
    %v58 = vrot.slane %v57, 2
    %v59 = vadd.f32 %v57, %v58
    %v60 = vrot.slane %v59, 1
    %v61 = vadd.f32 %v59, %v60
    %v62 = vmul.f32 %v61, %v51
    %v63 = vadd.f32 %v62, 1e-05
    %v64 = vrsqrt.pop %v63
    %v65 = vmul.f32 %v53, %v64
    %v66 = vpack.c.bf16 %v65, %v65
    %v67 = vld [vmem:[#allocation5] sm:$0xff]
    %v68 = vld [vmem:[#allocation5 + $0x8] sm:$0xff]
    %v69 = vld [vmem:[#allocation5 + $0x10] sm:$0xff]
    %v70 = vld [vmem:[#allocation5 + $0x18] sm:$0xff]
    %v71 = vld [vmem:[#allocation5 + $0x20] sm:$0xff]
    %v72 = vld [vmem:[#allocation5 + $0x28] sm:$0xff]
    %v73 = vld [vmem:[#allocation5 + $0x30] sm:$0xff]
    %v74 = vld [vmem:[#allocation5 + $0x38] sm:$0xff]
    %v75 = vld [vmem:[#allocation5 + $0x40] sm:$0xff]
    %v76 = vld [vmem:[#allocation5 + $0x48] sm:$0xff]
    %v77 = vld [vmem:[#allocation5 + $0x50] sm:$0xff]
    %v78 = vld [vmem:[#allocation5 + $0x58] sm:$0xff]
    %v91 = vunpack.c.l.b16 %v67
    %v92 = vunpack.c.h.b16 %v67
    %v93 = vunpack.c.l.b16 %v68
    %v94 = vunpack.c.h.b16 %v68
    %v95 = vunpack.c.l.b16 %v69
    %v96 = vunpack.c.h.b16 %v69
    %v97 = vunpack.c.l.b16 %v70
    %v98 = vunpack.c.h.b16 %v70
    %v99 = vunpack.c.l.b16 %v71
    %v100 = vunpack.c.h.b16 %v71
    %v101 = vunpack.c.l.b16 %v72
    %v102 = vunpack.c.h.b16 %v72
    %v103 = vunpack.c.l.b16 %v73
    %v104 = vunpack.c.h.b16 %v73
    %v105 = vunpack.c.l.b16 %v74
    %v106 = vunpack.c.h.b16 %v74
    %v107 = vunpack.c.l.b16 %v75
    %v108 = vunpack.c.h.b16 %v75
    %v109 = vunpack.c.l.b16 %v76
    %v110 = vunpack.c.h.b16 %v76
    %v111 = vunpack.c.l.b16 %v77
    %v112 = vunpack.c.h.b16 %v77
    %v113 = vunpack.c.l.b16 %v78
    %v114 = vunpack.c.h.b16 %v78
    %v115 = vpack.c.b16 %v93, %v91
    %v116 = vpack.c.b16 %v94, %v92
    %v117 = vpack.c.b16 %v97, %v95
    %v118 = vpack.c.b16 %v98, %v96
    %v119 = vpack.c.b16 %v101, %v99
    %v120 = vpack.c.b16 %v102, %v100
    %v121 = vpack.c.b16 %v105, %v103
    %v122 = vpack.c.b16 %v106, %v104
    %v123 = vpack.c.b16 %v109, %v107
    %v124 = vpack.c.b16 %v110, %v108
    %v125 = vpack.c.b16 %v113, %v111
    %v126 = vpack.c.b16 %v114, %v112
    %v140 = vsel %vm43, %v66, 0
    %142 = vmatprep.subr.bf16.mxu0 %v116
    %143 = vmatpush1.bf16.msra.mxu0 %v115
    %144 = vmatprep.subr.bf16.mxu0 %v118
    %145 = vmatpush1.bf16.msra.mxu0 %v117
    %146 = vmatprep.subr.bf16.mxu0 %v120
    %147 = vmatpush1.bf16.msra.mxu0 %v119
    %148 = vmatprep.subr.bf16.mxu0 %v122
    %149 = vmatpush1.bf16.msra.mxu0 %v121
    %150 = vmatprep.subr.bf16.mxu0 %v124
    %151 = vmatpush1.bf16.msra.mxu0 %v123
    %152 = vmatprep.subr.bf16.mxu0 %v126
    %153 = vmatpush1.bf16.msra.mxu0 %v125
    %154 = vmatprep.subr.bf16.mxu0 0
    %155 = vmatpush1.bf16.msra.mxu0 0
    %156 = vmatprep.subr.bf16.mxu0 0
    %157 = vmatpush1.bf16.msra.mxu0 0
    %158 = vmatprep.subr.bf16.mxu0 0
    %159 = vmatpush1.bf16.msra.mxu0 0
    %160 = vmatprep.subr.bf16.mxu0 0
    %161 = vmatpush1.bf16.msra.mxu0 0
    %162 = vmatprep.subr.bf16.mxu0 0
    %163 = vmatpush1.bf16.msra.mxu0 0
    %164 = vmatprep.subr.bf16.mxu0 0
    %165 = vmatpush1.bf16.msra.mxu0 0
    %166 = vmatprep.subr.bf16.mxu0 0
    %167 = vmatpush1.bf16.msra.mxu0 0
    %168 = vmatprep.subr.bf16.mxu0 0
    %169 = vmatpush1.bf16.msra.mxu0 0
    %170 = vmatprep.subr.bf16.mxu0 0
    %171 = vmatpush1.bf16.msra.mxu0 0
    %172 = vmatprep.subr.bf16.mxu0 0
    %173 = vmatpush1.bf16.msra.mxu0 0
    %174 = vmatprep.mubr.bf16.mxu0 0
    %175 = vmatmul.mubr.bf16.gmra.mrb[0].mxu0 %v140
    %v176 = vpop.f32.mrb[0].mxu0
    %v177 = vadd.f32 0.0, %v176
    %v178 = vpop.f32.mrb[0].mxu0
    %v179 = vadd.f32 0.0, %v178
    %v180 = vpop.f32.mrb[0].mxu0
    %v181 = vpop.f32.mrb[0].mxu0
    %182 = vdwg.mxu0
    %v183 = vrot.slane %v177, 4
    %v184 = vadd.f32 %v177, %v183
    %v185 = vrot.slane %v184, 2
    %v186 = vadd.f32 %v184, %v185
    %v187 = vrot.slane %v186, 1
    %v188 = vadd.f32 %v186, %v187
    %v189 = vrot.slane %v179, 4
    %v190 = vadd.f32 %v179, %v189
    %v191 = vrot.slane %v190, 2
    %v192 = vadd.f32 %v190, %v191
    %v193 = vrot.slane %v192, 1
    %v194 = vadd.f32 %v192, %v193
    %v195 = vmul.f32 %v188, %v51
    %v196 = vmul.f32 %v194, %v51
    %v197 = vsub.f32 %v177, %v195
    %v198 = vsub.f32 %v179, %v196
    %v199 = vmul.f32 %v197, %v197
    %v200 = vmul.f32 %v198, %v198
    %v201 = vrot.slane %v199, 4
    %v202 = vadd.f32 %v199, %v201
    %v203 = vrot.slane %v202, 2
    %v204 = vadd.f32 %v202, %v203
    %v205 = vrot.slane %v204, 1
    %v206 = vadd.f32 %v204, %v205
    %v207 = vrot.slane %v200, 4
    %v208 = vadd.f32 %v200, %v207
    %v209 = vrot.slane %v208, 2
    %v210 = vadd.f32 %v208, %v209
    %v211 = vrot.slane %v210, 1
    %v212 = vadd.f32 %v210, %v211
    %v213 = vmul.f32 %v206, %v51
    %v214 = vmul.f32 %v212, %v51
    %v215 = vadd.f32 %v213, 1e-05
    %v216 = vadd.f32 %v214, 1e-05
    %v217 = vrsqrt.pop %v215
    %v218 = vrsqrt.pop %v216
    %v219 = vmul.f32 %v197, %v217
    %v220 = vmul.f32 %v198, %v218
    %v221 = vld [vmem:[%s2] ss:$2 sm:$0x3]
    %v223 = vlaneseq
    %v224 = vshrl.u32 %v223, 7
    %v225 = vsub.s32 0, %v224
    %v226 = vrot.slane %v221, %v225
    %v227 = vlaneseq
    %v228 = vshrl.u32 %v227, 7
    %v229 = vsub.s32 1, %v228
    %v230 = vrot.slane %v221, %v229
    %v233 = vmul.f32 %v219, %v226
    %v234 = vmul.f32 %v220, %v230
    %s235 = scalar_lea.vmem %s2, 1
    %v236 = vld [vmem:[%s235] ss:$2 sm:$0x3]
    %v238 = vlaneseq
    %v239 = vshrl.u32 %v238, 7
    %v240 = vsub.s32 0, %v239
    %v241 = vrot.slane %v236, %v240
    %v242 = vlaneseq
    %v243 = vshrl.u32 %v242, 7
    %v244 = vsub.s32 1, %v243
    %v245 = vrot.slane %v236, %v244
    %v248 = vadd.f32 %v233, %v241
    %v249 = vadd.f32 %v234, %v245
    %250 = vst [vmem:[#allocation7] sm:$0xff] %v248
    %251 = vst [vmem:[#allocation7 + $0x8] sm:$0xff] %v249
    // Predicated region
    $region22: #{tpu_custom_call.1} parent=1 // pred_check
      _
    $region23: #{tpu_custom_call.1} parent=1 // pred_check_branch
      %253 = sbr.rel (0) target = $region25
    $region24: #{tpu_custom_call.1} parent=1 // pred_region
      %s255 = ssub.s32 256, 256
      %256 = vsyncadd [#allocation4], %s255
      %s258 = sshll.u32 [#allocation7], 4
      %s259 = int_to_ptr.vmem [resolvable:$true] %s258
      %261 = dma.vmem_to_hbm [thread:$0]  %s259, 256, %s3, [#allocation4]
    $region25: #{tpu_custom_call.1} parent=1 // pred_fallthru
      _
    // Predicated region
    $region26: #{tpu_custom_call.1} parent=1 // pred_check
      _
    $region27: #{tpu_custom_call.1} parent=1 // pred_check_branch
      %263 = sbr.rel (0) target = $region29
    $region28: #{tpu_custom_call.1} parent=1 // pred_region
      %264 = dma.done [#allocation4], 256
    $region29: #{tpu_custom_call.1} parent=1 // pred_fallthru
      _
    %265 = vsyncpa [#allocation3], 1
    %266 = vsyncpa [#allocation6], 1
    %267 = vsyncpa [#allocation4], 1

</llo_original>
